<compile_context>
chip_gen: v6e
topology: v6e:2x2x1
jax: 0.10.0
libtpu: 0.0.40
codegen_flags: <defaults>
</compile_context>

<pallas_src>
import math
import functools

import jax
import jax.numpy as jnp
from jax.experimental import pallas as pl
from jax.experimental.pallas import tpu as pltpu

_ALIGN = 16          # sublane alignment safe for bf16 (and f32) blocks
_VAL_LANES = 128     # lane-dense width for the value output (lane 0 meaningful)


def _round_up(x, m):
    return ((x + m - 1) // m) * m


def _cdiv(a, b):
    return -(-a // b)


def _choose_tile(B, tile_b):
    """Pick a batch tile: multiple of _ALIGN, <= tile_b, >=2 balanced grid
    steps when the batch is big enough (v7x megacore), minimal pad waste."""
    Bp = _round_up(max(B, 1), _ALIGN)
    max_tile = max(_ALIGN, _round_up(tile_b, _ALIGN))
    n_steps = max(2, _cdiv(Bp, max_tile))          # prefer >=2 steps for 2 TCs
    tile = _round_up(_cdiv(Bp, n_steps), _ALIGN)
    steps = _cdiv(Bp, tile)                         # tiny batches collapse to 1
    return tile, steps, steps * tile


# ----------------------------- Pallas kernel ------------------------------ #
def mlp_base_fused_kernel(x_ref, w1_ref, b1_ref, w2_ref, b2_ref,
                          wcl_ref, bcl_ref, h_ref, v_ref):
    # Layer 1: bf16 x bf16 MXU matmul, f32 accumulation; bias + tanh in f32.
    h1 = jnp.tanh(
        jnp.dot(x_ref[...], w1_ref[...], preferred_element_type=jnp.float32)
        + b1_ref[...])
    # Layer 2: block-diagonal fused weight keeps critic/actor halves
    # independent while presenting one full-width lane-dense MXU matmul.
    h2 = jnp.tanh(
        jnp.dot(h1.astype(w2_ref.dtype), w2_ref[...],
                preferred_element_type=jnp.float32)
        + b2_ref[...])
    # Hidden slab written back as bf16 (halves HBM writeback).
    h_ref[...] = h2.astype(h_ref.dtype)
    # Critic head fused: wcl_row is (1, 2H) with the actor half zeroed, so a
    # VPU multiply + XLU lane reduce over the resident f32 slab gives value.
    v = jnp.sum(h2 * wcl_ref[...], axis=-1, keepdims=True) + bcl_ref[...]
    # Lane-dense (tile, 128) store (broadcast), avoiding width-1 masked stores.
    v_ref[...] = jnp.broadcast_to(v, v_ref.shape)


def mlp_base_forward(x, fused, rnn_hxs, *, tile_b=1024):
    """MLPBase forward (non-recurrent). x: (B, num_inputs) f32.
    Returns (value (B,1) f32, hidden_actor (B,H) bf16, rnn_hxs)."""
    B, num_inputs = x.shape
    H2 = fused["w1"].shape[1]
    H = H2 // 2

    tile, steps, B_pad = _choose_tile(B, tile_b)
    x_in = x.astype(jnp.bfloat16)
    if B_pad != B:
        x_in = jnp.pad(x_in, ((0, B_pad - B), (0, 0)))
    grid = (steps,)

    batch_map = lambda i: (i, 0)
    const_map = lambda i: (0, 0)   # grid-invariant: weights stay resident

    h, v = pl.pallas_call(
        mlp_base_fused_kernel,
        out_shape=(
            jax.ShapeDtypeStruct((B_pad, H2), jnp.bfloat16),       # [hc | ha]
            jax.ShapeDtypeStruct((B_pad, _VAL_LANES), jnp.float32),  # value
        ),
        grid_spec=pltpu.PrefetchScalarGridSpec(
            num_scalar_prefetch=0,
            grid=grid,
            in_specs=[
                pl.BlockSpec((tile, num_inputs), batch_map),   # x (bf16, tiled)
                pl.BlockSpec((num_inputs, H2), const_map),     # fused W1 (bf16)
                pl.BlockSpec((1, H2), const_map),              # fused b1 (f32)
                pl.BlockSpec((H2, H2), const_map),             # fused W2 (bf16, block-diag)
                pl.BlockSpec((1, H2), const_map),              # fused b2 (f32)
                pl.BlockSpec((1, H2), const_map),              # wcl row, actor half zeroed
                pl.BlockSpec((1, 1), const_map),               # bcl scalar
            ],
            out_specs=[
                pl.BlockSpec((tile, H2), batch_map),
                pl.BlockSpec((tile, _VAL_LANES), batch_map),
            ],
        ),
        compiler_params=pltpu.CompilerParams(
            dimension_semantics=("parallel",),        # shard batch across TCs (v7x)
            vmem_limit_bytes=32 * 1024 * 1024,        # ample; footprint ~2 MB at tile=1024
        ),
    )(x_in, fused["w1"], fused["b1"], fused["w2"], fused["b2"],
      fused["wcl"], fused["bcl"])

    value = v[:B, :1]                  # lane 0 of the lane-dense value slab
    hidden_actor = h[:B, H:]           # bf16; slab consumed with an offset
    return value, hidden_actor, rnn_hxs


# -------------------- parameter construction / fusion ---------------------- #
def _orthogonal(key, shape, gain):
    """Mimics torch.nn.init.orthogonal_ (QR of a Gaussian) with given gain."""
    rows, cols = shape
    transposed = rows < cols
    mat_shape = (cols, rows) if transposed else (rows, cols)
    a = jax.random.normal(key, mat_shape, dtype=jnp.float32)
    q, r = jnp.linalg.qr(a)
    q = q * jnp.sign(jnp.diagonal(r))  # make decomposition unique
    if transposed:
        q = q.T
    return gain * q


def make_params(key, num_inputs, hidden_size):
    gain = math.sqrt(2.0)
    keys = jax.random.split(key, 5)
    # PyTorch Linear weight is (out, in); transpose to (in, out) for matmuls.
    wa1 = _orthogonal(keys[0], (hidden_size, num_inputs), gain).T
    wa2 = _orthogonal(keys[1], (hidden_size, hidden_size), gain).T
    wc1 = _orthogonal(keys[2], (hidden_size, num_inputs), gain).T
    wc2 = _orthogonal(keys[3], (hidden_size, hidden_size), gain).T
    wcl = _orthogonal(keys[4], (1, hidden_size), gain).T
    zeros = functools.partial(jnp.zeros, dtype=jnp.float32)
    return {
        "wa1": wa1, "ba1": zeros((1, hidden_size)),
        "wa2": wa2, "ba2": zeros((1, hidden_size)),
        "wc1": wc1, "bc1": zeros((1, hidden_size)),
        "wc2": wc2, "bc2": zeros((1, hidden_size)),
        "wcl": wcl, "bcl": zeros((1, 1)),
    }


def fuse_params(p):
    """Build the fused kernel parameters ONCE (do not call per forward step)."""
    H = p["wc1"].shape[1]
    w1 = jnp.concatenate([p["wc1"], p["wa1"]], axis=1).astype(jnp.bfloat16)   # (in, 2H)
    b1 = jnp.concatenate([p["bc1"], p["ba1"]], axis=1)                        # (1, 2H) f32
    z = jnp.zeros((H, H), jnp.float32)
    w2 = jnp.concatenate(
        [jnp.concatenate([p["wc2"], z], axis=1),
         jnp.concatenate([z, p["wa2"]], axis=1)], axis=0).astype(jnp.bfloat16)  # (2H, 2H)
    b2 = jnp.concatenate([p["bc2"], p["ba2"]], axis=1)                        # (1, 2H) f32
    # Critic-head row laid over the full 2H slab lanes (actor half zeroed).
    wcl = jnp.concatenate([p["wcl"].T, jnp.zeros((1, H), jnp.float32)], axis=1)  # (1, 2H)
    return {"w1": w1, "b1": b1, "w2": w2, "b2": b2, "wcl": wcl, "bcl": p["bcl"]}


def reference_forward(x, params, rnn_hxs):
    hc = jnp.tanh(x @ params["wc1"] + params["bc1"])
    hc = jnp.tanh(hc @ params["wc2"] + params["bc2"])
    ha = jnp.tanh(x @ params["wa1"] + params["ba1"])
    ha = jnp.tanh(ha @ params["wa2"] + params["ba2"])
    value = hc @ params["wcl"] + params["bcl"]
    return value, ha, rnn_hxs


# ---------------------------------- main ----------------------------------- #
if __name__ == "__main__":
    key = jax.random.PRNGKey(0)
    k_x, k_p = jax.random.split(key)

    batch = 8
    num_inputs = 32
    hidden_size = 64

    x = jax.random.normal(k_x, (batch, num_inputs), dtype=jnp.float32)
    # non-recurrent: recurrent_hidden_state_size == 1
    rnn_hxs = jnp.zeros((batch, 1), dtype=jnp.float32)
    masks = jnp.ones((batch, 1), dtype=jnp.float32)  # unused (recurrent=False)

    params = make_params(k_p, num_inputs, hidden_size)
    fused = fuse_params(params)   # built once, outside the forward

    value, hidden_actor, out_hxs = mlp_base_forward(x, fused, rnn_hxs)
    jax.block_until_ready((value, hidden_actor, out_hxs))

    # sanity check vs. plain-JAX f32 reference (bf16 I/O -> relaxed tolerance)
    ref_value, ref_actor, _ = reference_forward(x, params, rnn_hxs)
    assert value.shape == (batch, 1)
    assert hidden_actor.shape == (batch, hidden_size)
    assert jnp.allclose(value, ref_value, atol=3e-2, rtol=3e-2)
    assert jnp.allclose(hidden_actor.astype(jnp.float32), ref_actor,
                        atol=3e-2, rtol=3e-2)

    print("KERNEL_OK")
</pallas_src>

<mosaic_0001>
module attributes {stable_mosaic.version = 11 : i64} {
  func.func @mlp_base_fused_kernel(%arg0: i32, %arg1: memref<16x32xbf16, #tpu.memory_space<vmem>>, %arg2: memref<32x128xbf16, #tpu.memory_space<vmem>>, %arg3: memref<1x128xf32, #tpu.memory_space<vmem>>, %arg4: memref<128x128xbf16, #tpu.memory_space<vmem>>, %arg5: memref<1x128xf32, #tpu.memory_space<vmem>>, %arg6: memref<1x128xf32, #tpu.memory_space<vmem>>, %arg7: memref<1x1xf32, #tpu.memory_space<vmem>>, %arg8: memref<16x128xbf16, #tpu.memory_space<vmem>>, %arg9: memref<16x128xf32, #tpu.memory_space<vmem>>) attributes {dimension_semantics = [#tpu.dimension_semantics<parallel>], iteration_bounds = array<i64: 1>, scalar_prefetch = 0 : i64, scratch_operands = 0 : i64, tpu.core_type = #tpu.core_type<tc>, window_params = [{transform_indices = @transform_0, window_bounds = array<i64: 16, 32>}, {pipeline_mode = #tpu.pipeline_mode<synchronous>, transform_indices = @transform_1, window_bounds = array<i64: 32, 128>}, {pipeline_mode = #tpu.pipeline_mode<synchronous>, transform_indices = @transform_2, window_bounds = array<i64: 1, 128>}, {pipeline_mode = #tpu.pipeline_mode<synchronous>, transform_indices = @transform_3, window_bounds = array<i64: 128, 128>}, {pipeline_mode = #tpu.pipeline_mode<synchronous>, transform_indices = @transform_4, window_bounds = array<i64: 1, 128>}, {pipeline_mode = #tpu.pipeline_mode<synchronous>, transform_indices = @transform_5, window_bounds = array<i64: 1, 128>}, {pipeline_mode = #tpu.pipeline_mode<synchronous>, transform_indices = @transform_6, window_bounds = array<i64: 1, 1>}, {transform_indices = @transform_7, window_bounds = array<i64: 16, 128>}, {transform_indices = @transform_8, window_bounds = array<i64: 16, 128>}]} {
    %c0 = arith.constant 0 : index
    %c0_0 = arith.constant 0 : index
    %0 = vector.load %arg1[%c0, %c0_0] : memref<16x32xbf16, #tpu.memory_space<vmem>>, vector<16x32xbf16>
    %c0_1 = arith.constant 0 : index
    %c0_2 = arith.constant 0 : index
    %1 = vector.load %arg2[%c0_1, %c0_2] : memref<32x128xbf16, #tpu.memory_space<vmem>>, vector<32x128xbf16>
    %cst = arith.constant dense<0.000000e+00> : vector<16x128xf32>
    %2 = tpu.matmul %0, %1, %cst {dimension_numbers = #tpu.dot_dimension_numbers<[1], [0], [0], [1], [0, 0, 1, 1], [], []>} : vector<16x32xbf16>, vector<32x128xbf16>, vector<16x128xf32> -> vector<16x128xf32>
    %c0_3 = arith.constant 0 : index
    %c0_4 = arith.constant 0 : index
    %3 = vector.load %arg3[%c0_3, %c0_4] : memref<1x128xf32, #tpu.memory_space<vmem>>, vector<1x128xf32>
    %4 = vector.broadcast %3 : vector<1x128xf32> to vector<16x128xf32>
    %5 = arith.addf %2, %4 : vector<16x128xf32>
    %6 = math.tanh %5 : vector<16x128xf32>
    %7 = arith.truncf %6 : vector<16x128xf32> to vector<16x128xbf16>
    %c0_5 = arith.constant 0 : index
    %c0_6 = arith.constant 0 : index
    %8 = vector.load %arg4[%c0_5, %c0_6] : memref<128x128xbf16, #tpu.memory_space<vmem>>, vector<128x128xbf16>
    %cst_7 = arith.constant dense<0.000000e+00> : vector<16x128xf32>
    %9 = tpu.matmul %7, %8, %cst_7 {dimension_numbers = #tpu.dot_dimension_numbers<[1], [0], [0], [1], [0, 0, 1, 1], [], []>} : vector<16x128xbf16>, vector<128x128xbf16>, vector<16x128xf32> -> vector<16x128xf32>
    %c0_8 = arith.constant 0 : index
    %c0_9 = arith.constant 0 : index
    %10 = vector.load %arg5[%c0_8, %c0_9] : memref<1x128xf32, #tpu.memory_space<vmem>>, vector<1x128xf32>
    %11 = vector.broadcast %10 : vector<1x128xf32> to vector<16x128xf32>
    %12 = arith.addf %9, %11 : vector<16x128xf32>
    %13 = math.tanh %12 : vector<16x128xf32>
    %14 = arith.truncf %13 : vector<16x128xf32> to vector<16x128xbf16>
    %c0_10 = arith.constant 0 : index
    %c0_11 = arith.constant 0 : index
    %15 = vector.load %arg8[%c0_10, %c0_11] : memref<16x128xbf16, #tpu.memory_space<vmem>>, vector<16x128xbf16>
    tpu.vector_store %arg8[%c0_10, %c0_11], %14 {strides = array<i32>} : memref<16x128xbf16, #tpu.memory_space<vmem>>, vector<16x128xbf16>,
    %c0_12 = arith.constant 0 : index
    %c0_13 = arith.constant 0 : index
    %16 = vector.load %arg6[%c0_12, %c0_13] : memref<1x128xf32, #tpu.memory_space<vmem>>, vector<1x128xf32>
    %17 = vector.broadcast %16 : vector<1x128xf32> to vector<16x128xf32>
    %18 = arith.mulf %13, %17 : vector<16x128xf32>
    %cst_14 = arith.constant dense<0.000000e+00> : vector<16xf32>
    %19 = vector.multi_reduction <add>, %18, %cst_14 [1] : vector<16x128xf32> to vector<16xf32>
    %20 = vector.shape_cast %19 : vector<16xf32> to vector<16x1xf32>
    %c0_15 = arith.constant 0 : index
    %c0_16 = arith.constant 0 : index
    %21 = vector.load %arg7[%c0_15, %c0_16] : memref<1x1xf32, #tpu.memory_space<vmem>>, vector<1x1xf32>
    %22 = vector.broadcast %21 : vector<1x1xf32> to vector<16x1xf32>
    %23 = arith.addf %20, %22 : vector<16x1xf32>
    %24 = vector.shape_cast %23 : vector<16x1xf32> to vector<16x1xf32>
    %25 = vector.broadcast %24 : vector<16x1xf32> to vector<16x128xf32>
    %c0_17 = arith.constant 0 : index
    %c0_18 = arith.constant 0 : index
    %26 = vector.load %arg9[%c0_17, %c0_18] : memref<16x128xf32, #tpu.memory_space<vmem>>, vector<16x128xf32>
    tpu.vector_store %arg9[%c0_17, %c0_18], %25 {strides = array<i32>} : memref<16x128xf32, #tpu.memory_space<vmem>>, vector<16x128xf32>,
    return
  }
  func.func @transform_0(%arg0: i32) -> (i32, i32) {
    %c0_i32 = arith.constant 0 : i32
    %c0_i32_0 = arith.constant 0 : i32
    return %arg0, %c0_i32 : i32, i32
  }
  func.func @transform_1(%arg0: i32) -> (i32, i32) {
    %c0_i32 = arith.constant 0 : i32
    %c0_i32_0 = arith.constant 0 : i32
    %c0_i32_1 = arith.constant 0 : i32
    return %c0_i32, %c0_i32_0 : i32, i32
  }
  func.func @transform_2(%arg0: i32) -> (i32, i32) {
    %c0_i32 = arith.constant 0 : i32
    %c0_i32_0 = arith.constant 0 : i32
    %c0_i32_1 = arith.constant 0 : i32
    return %c0_i32, %c0_i32_0 : i32, i32
  }
  func.func @transform_3(%arg0: i32) -> (i32, i32) {
    %c0_i32 = arith.constant 0 : i32
    %c0_i32_0 = arith.constant 0 : i32
    %c0_i32_1 = arith.constant 0 : i32
    return %c0_i32, %c0_i32_0 : i32, i32
  }
  func.func @transform_4(%arg0: i32) -> (i32, i32) {
    %c0_i32 = arith.constant 0 : i32
    %c0_i32_0 = arith.constant 0 : i32
    %c0_i32_1 = arith.constant 0 : i32
    return %c0_i32, %c0_i32_0 : i32, i32
  }
  func.func @transform_5(%arg0: i32) -> (i32, i32) {
    %c0_i32 = arith.constant 0 : i32
    %c0_i32_0 = arith.constant 0 : i32
    %c0_i32_1 = arith.constant 0 : i32
    return %c0_i32, %c0_i32_0 : i32, i32
  }
  func.func @transform_6(%arg0: i32) -> (i32, i32) {
    %c0_i32 = arith.constant 0 : i32
    %c0_i32_0 = arith.constant 0 : i32
    %c0_i32_1 = arith.constant 0 : i32
    return %c0_i32, %c0_i32_0 : i32, i32
  }
  func.func @transform_7(%arg0: i32) -> (i32, i32) {
    %c0_i32 = arith.constant 0 : i32
    %c0_i32_0 = arith.constant 0 : i32
    return %arg0, %c0_i32 : i32, i32
  }
  func.func @transform_8(%arg0: i32) -> (i32, i32) {
    %c0_i32 = arith.constant 0 : i32
    %c0_i32_0 = arith.constant 0 : i32
    return %arg0, %c0_i32 : i32, i32
  }
}

</mosaic_0001>

<llo_original>
// kernel: tpu_custom_call.1
$region0: #{tpu_custom_call.1}
  #allocation0 [shape = 'u32[]', space=smem, size = 0x4, offset = 0x4, fixed_abs, tag = 'smem constant byte address 0x4 - core index']
  #allocation1 [shape = 'u32[144,128]{1,0:T(1,128)}', space=vmem, size = 0x12000, scoped, tag = 'internal scratch']
  #allocation2 [shape = 'f32[1,1]{1,0:T(1,128)S(1)}', space=vmem, size = 0x200, scoped, tag = 'scoped memory for tpu_custom_call.1']
  %s0 = inlined_call_operand.hbm [shape: bf16[16,32], index: 0, kind: input, shape index: {}]
  %s1 = inlined_call_operand.hbm [shape: bf16[32,128], index: 1, kind: input, shape index: {}]
  %s2 = inlined_call_operand.vmem [shape: f32[1,128], index: 2, kind: input, shape index: {}]
  %s3 = inlined_call_operand.hbm [shape: bf16[128,128], index: 3, kind: input, shape index: {}]
  %s4 = inlined_call_operand.vmem [shape: f32[1,128], index: 4, kind: input, shape index: {}]
  %s5 = inlined_call_operand.vmem [shape: f32[1,128], index: 5, kind: input, shape index: {}]
  %s6 = inlined_call_operand.<no memory space> [shape: f32[1,1], index: 6, kind: input, shape index: {}]
  %s7 = inlined_call_operand.hbm [shape: bf16[16,128], index: 7, kind: output, shape index: {0}]
  %s8 = inlined_call_operand.hbm [shape: f32[16,128], index: 8, kind: output, shape index: {1}]
  %9 = xla_tuple %s7, %s8
  %s10 = sld [smem:[#allocation0]]
  $region58: #{tpu_custom_call.1} parent=0
    _
  %s12 = ssub.s32 1, %s10
  %s13 = scalar_select 0, %s12, %s10
  %v14 = vstv %s6
  %15 = vst [vmem:[#allocation2] sm:$0x1] %v14
  $region1: #{tpu_custom_call.1} parent=0
    #allocation3 [shape = 'u8[4096]{0}', space=vmem, size = 0x1000, scoped, tag = 'input window, operand 0, single buffered']
    #allocation4 [shape = 's32[1]{0}', space=sflag, size = 0x4, scoped, tag = 'scoped memory for tpu_custom_call.1']
    #allocation5 [shape = 's32[1]{0}', space=sflag, size = 0x4, scoped, tag = 'scoped memory for tpu_custom_call.1']
    #allocation6 [shape = 'u8[8192]{0}', space=vmem, size = 0x2000, scoped, tag = 'input window, operand 1, single buffered']
    #allocation7 [shape = 's32[1]{0}', space=sflag, size = 0x4, scoped, tag = 'scoped memory for tpu_custom_call.1']
    #allocation8 [shape = 'u8[32768]{0}', space=vmem, size = 0x8000, scoped, tag = 'input window, operand 3, single buffered']
    #allocation9 [shape = 'u8[4096]{0}', space=vmem, size = 0x1000, scoped, tag = 'output window, operand 0, single buffered']
    #allocation10 [shape = 'u8[8192]{0}', space=vmem, size = 0x2000, scoped, tag = 'output window, operand 1, single buffered']
    #allocation11 [shape = 's32[1]{0}', space=sflag, size = 0x4, scoped, tag = 'scoped memory for tpu_custom_call.1']
    %16 = vsyncpa [#allocation4], 0
    %17 = vsyncpa [#allocation7], 0
    %18 = vsyncpa [#allocation5], 0
    %19 = vsyncpa [#allocation11], 0
    // Predicated region
    $region2: #{tpu_custom_call.1} parent=1 // pred_check
      _
    $region3: #{tpu_custom_call.1} parent=1 // pred_check_branch
      %21 = sbr.rel (0) target = $region5
    $region4: #{tpu_custom_call.1} parent=1 // pred_region
      %s23 = ssub.s32 128, 128
      %24 = vsyncadd [#allocation4], %s23
      %s25 = sshll.u32 [#allocation3], 4
      %s26 = int_to_ptr.vmem [resolvable:$true] %s25
      %31 = dma.hbm_to_vmem [thread:$0]  %s0, 128, %s26, [#allocation4], 64, 64, 4
    $region5: #{tpu_custom_call.1} parent=1 // pred_fallthru
      _
    // Predicated region
    $region6: #{tpu_custom_call.1} parent=1 // pred_check
      _
    $region7: #{tpu_custom_call.1} parent=1 // pred_check_branch
      %33 = sbr.rel (0) target = $region9
    $region8: #{tpu_custom_call.1} parent=1 // pred_region
      %s35 = ssub.s32 256, 256
      %36 = vsyncadd [#allocation7], %s35
      %s37 = sshll.u32 [#allocation6], 4
      %s38 = int_to_ptr.vmem [resolvable:$true] %s37
      %43 = dma.hbm_to_vmem [thread:$0]  %s1, 256, %s38, [#allocation7], 64, 64, 4
    $region9: #{tpu_custom_call.1} parent=1 // pred_fallthru
      _
    // Predicated region
    $region10: #{tpu_custom_call.1} parent=1 // pred_check
      _
    $region11: #{tpu_custom_call.1} parent=1 // pred_check_branch
      %45 = sbr.rel (0) target = $region13
    $region12: #{tpu_custom_call.1} parent=1 // pred_region
      _
    $region13: #{tpu_custom_call.1} parent=1 // pred_fallthru
      _
    // Predicated region
    $region14: #{tpu_custom_call.1} parent=1 // pred_check
      _
    $region15: #{tpu_custom_call.1} parent=1 // pred_check_branch
      %47 = sbr.rel (0) target = $region17
    $region16: #{tpu_custom_call.1} parent=1 // pred_region
      %s49 = ssub.s32 1024, 1024
      %50 = vsyncadd [#allocation7], %s49
      %s51 = sshll.u32 [#allocation8], 4
      %s52 = int_to_ptr.vmem [resolvable:$true] %s51
      %57 = dma.hbm_to_vmem [thread:$0]  %s3, 1024, %s52, [#allocation7], 64, 64, 4
    $region17: #{tpu_custom_call.1} parent=1 // pred_fallthru
      _
    // Predicated region
    $region18: #{tpu_custom_call.1} parent=1 // pred_check
      _
    $region19: #{tpu_custom_call.1} parent=1 // pred_check_branch
      %59 = sbr.rel (0) target = $region21
    $region20: #{tpu_custom_call.1} parent=1 // pred_region
      _
    $region21: #{tpu_custom_call.1} parent=1 // pred_fallthru
      _
    // Predicated region
    $region22: #{tpu_custom_call.1} parent=1 // pred_check
      _
    $region23: #{tpu_custom_call.1} parent=1 // pred_check_branch
      %61 = sbr.rel (0) target = $region25
    $region24: #{tpu_custom_call.1} parent=1 // pred_region
      _
    $region25: #{tpu_custom_call.1} parent=1 // pred_fallthru
      _
    // Predicated region
    $region26: #{tpu_custom_call.1} parent=1 // pred_check
      _
    $region27: #{tpu_custom_call.1} parent=1 // pred_check_branch
      %63 = sbr.rel (0) target = $region29
    $region28: #{tpu_custom_call.1} parent=1 // pred_region
      _
    $region29: #{tpu_custom_call.1} parent=1 // pred_fallthru
      _
    // Predicated region
    $region30: #{tpu_custom_call.1} parent=1 // pred_check
      _
    $region31: #{tpu_custom_call.1} parent=1 // pred_check_branch
      %65 = sbr.rel (0) target = $region33
    $region32: #{tpu_custom_call.1} parent=1 // pred_region
      %66 = dma.done [#allocation4], 128
    $region33: #{tpu_custom_call.1} parent=1 // pred_fallthru
      _
    // Predicated region
    $region34: #{tpu_custom_call.1} parent=1 // pred_check
      _
    $region35: #{tpu_custom_call.1} parent=1 // pred_check_branch
      %68 = sbr.rel (0) target = $region37
    $region36: #{tpu_custom_call.1} parent=1 // pred_region
      %69 = dma.done [#allocation7], 256
    $region37: #{tpu_custom_call.1} parent=1 // pred_fallthru
      _
    // Predicated region
    $region38: #{tpu_custom_call.1} parent=1 // pred_check
      _
    $region39: #{tpu_custom_call.1} parent=1 // pred_check_branch
      %71 = sbr.rel (0) target = $region41
    $region40: #{tpu_custom_call.1} parent=1 // pred_region
      %72 = dma.done [#allocation7], 1024
    $region41: #{tpu_custom_call.1} parent=1 // pred_fallthru
      _
    %v74 = vld [vmem:[#allocation3] sm:$0xf]
    %v75 = vld [vmem:[#allocation3 + $0x4] sm:$0xf]
    %v76 = vld [vmem:[#allocation6] sm:$0xf]
    %v77 = vld [vmem:[#allocation6 + $0x4] sm:$0xf]
    %v78 = vld [vmem:[#allocation6 + $0x8] sm:$0xf]
    %v79 = vld [vmem:[#allocation6 + $0xc] sm:$0xf]
    %v80 = vld [vmem:[%s2] sm:$0x1]
    %v82 = vlaneseq
    %v83 = vshrl.u32 %v82, 7
    %v84 = vsub.s32 0, %v83
    %v85 = vrot.slane %v80, %v84
    %v89 = vunpack.c.l.b16 %v74
    %v90 = vunpack.c.l.b16 %v75
    %v91 = vpack.c.b16 %v90, %v89
    %v96 = vunpack.c.l.b16 %v76
    %v97 = vunpack.c.l.b16 %v77
    %v98 = vunpack.c.l.b16 %v78
    %v99 = vunpack.c.l.b16 %v79
    %v100 = vpack.c.b16 %v97, %v96
    %v101 = vpack.c.b16 %v99, %v98
    %vm104 = vcmask 261120
    %v106 = vsel %vm104, %v91, 0
    %108 = vmatprep.subr.bf16.mxu0 0
    %109 = vmatpush1.bf16.msra.mxu0 0
    %110 = vmatprep.subr.bf16.mxu0 0
    %111 = vmatpush1.bf16.msra.mxu0 0
    %112 = vmatprep.subr.bf16.mxu0 0
    %113 = vmatpush1.bf16.msra.mxu0 0
    %114 = vmatprep.subr.bf16.mxu0 0
    %115 = vmatpush1.bf16.msra.mxu0 0
    %116 = vmatprep.subr.bf16.mxu0 0
    %117 = vmatpush1.bf16.msra.mxu0 0
    %118 = vmatprep.subr.bf16.mxu0 0
    %119 = vmatpush1.bf16.msra.mxu0 0
    %120 = vmatprep.subr.bf16.mxu0 0
    %121 = vmatpush1.bf16.msra.mxu0 %v101
    %122 = vmatprep.subr.bf16.mxu0 0
    %123 = vmatpush1.bf16.msra.mxu0 %v100
    %124 = vmatprep.subr.bf16.mxu0 0
    %125 = vmatpush2.bf16.msra.mxu0 0
    %126 = vmatprep.subr.bf16.mxu0 0
    %127 = vmatpush2.bf16.msra.mxu0 0
    %128 = vmatprep.subr.bf16.mxu0 0
    %129 = vmatpush2.bf16.msra.mxu0 0
    %130 = vmatprep.subr.bf16.mxu0 0
    %131 = vmatpush2.bf16.msra.mxu0 0
    %132 = vmatprep.subr.bf16.mxu0 0
    %133 = vmatpush2.bf16.msra.mxu0 0
    %134 = vmatprep.subr.bf16.mxu0 0
    %135 = vmatpush2.bf16.msra.mxu0 0
    %136 = vmatprep.subr.bf16.mxu0 0
    %137 = vmatpush2.bf16.msra.mxu0 0
    %138 = vmatprep.subr.bf16.mxu0 0
    %139 = vmatpush2.bf16.msra.mxu0 0
    %140 = vmatprep.mubr.bf16.mxu0 0
    %141 = vmatmul.mubr.bf16.gmra.mxu0 %v106
    %v142 = vpop.f32.mrf.mxu0
    %v143 = vadd.f32 %v85, %v142
    %v144 = vpop.f32.mrf.mxu0
    %v145 = vpop.f32.mrf.mxu0
    %v146 = vadd.f32 %v85, %v145
    %v147 = vpop.f32.mrf.mxu0
    %148 = vdwg.mxu0
    %v149 = vtanh.pop %v143
    %v150 = vtanh.pop %v146
    %v151 = vpack.c.bf16 %v150, %v149
    %v152 = vld [vmem:[#allocation8] sm:$0xf]
    %v153 = vld [vmem:[#allocation8 + $0x4] sm:$0xf]
    %v154 = vld [vmem:[#allocation8 + $0x8] sm:$0xf]
    %v155 = vld [vmem:[#allocation8 + $0xc] sm:$0xf]
    %v156 = vld [vmem:[#allocation8 + $0x10] sm:$0xf]
    %v157 = vld [vmem:[#allocation8 + $0x14] sm:$0xf]
    %v158 = vld [vmem:[#allocation8 + $0x18] sm:$0xf]
    %v159 = vld [vmem:[#allocation8 + $0x1c] sm:$0xf]
    %v160 = vld [vmem:[#allocation8 + $0x20] sm:$0xf]
    %v161 = vld [vmem:[#allocation8 + $0x24] sm:$0xf]
    %v162 = vld [vmem:[#allocation8 + $0x28] sm:$0xf]
    %v163 = vld [vmem:[#allocation8 + $0x2c] sm:$0xf]
    %v164 = vld [vmem:[#allocation8 + $0x30] sm:$0xf]
    %v165 = vld [vmem:[#allocation8 + $0x34] sm:$0xf]
    %v166 = vld [vmem:[#allocation8 + $0x38] sm:$0xf]
    %v167 = vld [vmem:[#allocation8 + $0x3c] sm:$0xf]
    %v168 = vld [vmem:[%s4] sm:$0x1]
    %v170 = vlaneseq
    %v171 = vshrl.u32 %v170, 7
    %v172 = vsub.s32 0, %v171
    %v173 = vrot.slane %v168, %v172
    %v191 = vunpack.c.l.b16 %v152
    %v192 = vunpack.c.l.b16 %v153
    %v193 = vunpack.c.l.b16 %v154
    %v194 = vunpack.c.l.b16 %v155
    %v195 = vunpack.c.l.b16 %v156
    %v196 = vunpack.c.l.b16 %v157
    %v197 = vunpack.c.l.b16 %v158
    %v198 = vunpack.c.l.b16 %v159
    %v199 = vunpack.c.l.b16 %v160
    %v200 = vunpack.c.l.b16 %v161
    %v201 = vunpack.c.l.b16 %v162
    %v202 = vunpack.c.l.b16 %v163
    %v203 = vunpack.c.l.b16 %v164
    %v204 = vunpack.c.l.b16 %v165
    %v205 = vunpack.c.l.b16 %v166
    %v206 = vunpack.c.l.b16 %v167
    %v207 = vpack.c.b16 %v192, %v191
    %v208 = vpack.c.b16 %v194, %v193
    %v209 = vpack.c.b16 %v196, %v195
    %v210 = vpack.c.b16 %v198, %v197
    %v211 = vpack.c.b16 %v200, %v199
    %v212 = vpack.c.b16 %v202, %v201
    %v213 = vpack.c.b16 %v204, %v203
    %v214 = vpack.c.b16 %v206, %v205
    %223 = vmatprep.subr.bf16.mxu0 0
    %224 = vmatpush1.bf16.msra.mxu0 %v214
    %225 = vmatprep.subr.bf16.mxu0 0
    %226 = vmatpush1.bf16.msra.mxu0 %v213
    %227 = vmatprep.subr.bf16.mxu0 0
    %228 = vmatpush1.bf16.msra.mxu0 %v212
    %229 = vmatprep.subr.bf16.mxu0 0
    %230 = vmatpush1.bf16.msra.mxu0 %v211
    %231 = vmatprep.subr.bf16.mxu0 0
    %232 = vmatpush1.bf16.msra.mxu0 %v210
    %233 = vmatprep.subr.bf16.mxu0 0
    %234 = vmatpush1.bf16.msra.mxu0 %v209
    %235 = vmatprep.subr.bf16.mxu0 0
    %236 = vmatpush1.bf16.msra.mxu0 %v208
    %237 = vmatprep.subr.bf16.mxu0 0
    %238 = vmatpush1.bf16.msra.mxu0 %v207
    %239 = vmatprep.subr.bf16.mxu0 0
    %240 = vmatpush2.bf16.msra.mxu0 0
    %241 = vmatprep.subr.bf16.mxu0 0
    %242 = vmatpush2.bf16.msra.mxu0 0
    %243 = vmatprep.subr.bf16.mxu0 0
    %244 = vmatpush2.bf16.msra.mxu0 0
    %245 = vmatprep.subr.bf16.mxu0 0
    %246 = vmatpush2.bf16.msra.mxu0 0
    %247 = vmatprep.subr.bf16.mxu0 0
    %248 = vmatpush2.bf16.msra.mxu0 0
    %249 = vmatprep.subr.bf16.mxu0 0
    %250 = vmatpush2.bf16.msra.mxu0 0
    %251 = vmatprep.subr.bf16.mxu0 0
    %252 = vmatpush2.bf16.msra.mxu0 0
    %253 = vmatprep.subr.bf16.mxu0 0
    %254 = vmatpush2.bf16.msra.mxu0 0
    %255 = vmatprep.mubr.bf16.mxu0 0
    %256 = vmatmul.mubr.bf16.gmra.mxu0 %v151
    %v257 = vpop.f32.mrf.mxu0
    %v258 = vadd.f32 %v173, %v257
    %v259 = vpop.f32.mrf.mxu0
    %v260 = vpop.f32.mrf.mxu0
    %v261 = vadd.f32 %v173, %v260
    %v262 = vpop.f32.mrf.mxu0
    %263 = vdwg.mxu0
    %v264 = vtanh.pop %v258
    %v265 = vtanh.pop %v261
    %v266 = vpack.c.bf16 %v265, %v264
    %v268 = vunpack.c.l.b16 %v266
    %v269 = vunpack.c.h.b16 %v266
    %v270 = vpack.c.b16 %v268, %v268
    %v271 = vpack.c.b16 %v269, %v269
    %274 = vst [vmem:[#allocation9] sm:$0xf] %v270
    %275 = vst [vmem:[#allocation9 + $0x4] sm:$0xf] %v271
    %v276 = vld [vmem:[%s5] sm:$0x1]
    %v278 = vlaneseq
    %v279 = vshrl.u32 %v278, 7
    %v280 = vsub.s32 0, %v279
    %v281 = vrot.slane %v276, %v280
    %v283 = vmul.f32 %v264, %v281
    %v284 = vmul.f32 %v265, %v281
    %285 = vadd.xlane.f32.xlu0 %v283
    %v286 = vpop.xlane.xlu0 %285
    %287 = vadd.xlane.f32.xlu0 %v284
    %v288 = vpop.xlane.xlu0 %287
    %v289 = vld [vmem:[#allocation2] sm:$0x1]
    %v291 = vlaneseq
    %v292 = vshrl.u32 %v291, 7
    %v293 = vsub.s32 0, %v292
    %v294 = vrot.slane %v289, %v293
    %v296 = vadd.f32 %v286, %v294
    %v297 = vadd.f32 %v288, %v294
    %299 = vset.pattern.permute.xlu0 0
    %300 = vperm.xlu0 %299, %v296
    %v301 = vpop.permute.xlu0 %300
    %304 = vset.pattern.permute.xlu0 0
    %305 = vperm.xlu0 %304, %v297
    %v306 = vpop.permute.xlu0 %305
    %308 = vst [vmem:[#allocation10] sm:$0xff] %v301
    %309 = vst [vmem:[#allocation10 + $0x8] sm:$0xff] %v306
    // Predicated region
    $region42: #{tpu_custom_call.1} parent=1 // pred_check
      _
    $region43: #{tpu_custom_call.1} parent=1 // pred_check_branch
      %311 = sbr.rel (0) target = $region45
    $region44: #{tpu_custom_call.1} parent=1 // pred_region
      %s313 = ssub.s32 128, 128
      %314 = vsyncadd [#allocation5], %s313
      %s315 = sshll.u32 [#allocation9], 4
      %s316 = int_to_ptr.vmem [resolvable:$true] %s315
      %321 = dma.vmem_to_hbm [thread:$0]  %s316, 128, %s7, [#allocation5], 64, 64, 4
    $region45: #{tpu_custom_call.1} parent=1 // pred_fallthru
      _
    // Predicated region
    $region46: #{tpu_custom_call.1} parent=1 // pred_check
      _
    $region47: #{tpu_custom_call.1} parent=1 // pred_check_branch
      %323 = sbr.rel (0) target = $region49
    $region48: #{tpu_custom_call.1} parent=1 // pred_region
      %s325 = ssub.s32 256, 256
      %326 = vsyncadd [#allocation11], %s325
      %s327 = sshll.u32 [#allocation10], 4
      %s328 = int_to_ptr.vmem [resolvable:$true] %s327
      %333 = dma.vmem_to_hbm [thread:$0]  %s328, 256, %s8, [#allocation11], 128, 128, 8
    $region49: #{tpu_custom_call.1} parent=1 // pred_fallthru
      _
    // Predicated region
    $region50: #{tpu_custom_call.1} parent=1 // pred_check
      _
    $region51: #{tpu_custom_call.1} parent=1 // pred_check_branch
      %335 = sbr.rel (0) target = $region53
    $region52: #{tpu_custom_call.1} parent=1 // pred_region
      %336 = dma.done [#allocation5], 128
    $region53: #{tpu_custom_call.1} parent=1 // pred_fallthru
      _
    // Predicated region
    $region54: #{tpu_custom_call.1} parent=1 // pred_check
      _
    $region55: #{tpu_custom_call.1} parent=1 // pred_check_branch
      %338 = sbr.rel (0) target = $region57
    $region56: #{tpu_custom_call.1} parent=1 // pred_region
      %339 = dma.done [#allocation11], 256
    $region57: #{tpu_custom_call.1} parent=1 // pred_fallthru
      _
    %340 = vsyncpa [#allocation4], 1
    %341 = vsyncpa [#allocation7], 1
    %342 = vsyncpa [#allocation5], 1
    %343 = vsyncpa [#allocation11], 1

</llo_original>
